<compile_context>
chip_gen: v7x
topology: tpu7x:2x2x1
jax: 0.10.0
libtpu: 0.0.40
codegen_flags: <defaults>
</compile_context>

<pallas_src>
import functools

import jax
import jax.numpy as jnp
from jax.experimental import pallas as pl
from jax.experimental.pallas import tpu as pltpu

INPUT_SIZE = 200
PADDED_INPUT_SIZE = 256           # zero-padded K for the MXU / (8,128) tiling
HIDDEN_SIZE = 512
INTERMEDIATE_SIZE = 256
OUT_SIZE = 1
BN_EPS = 1e-5

_VMEM_LIMIT_BYTES = 48 * 1024 * 1024   # < 64 MiB (v7x physical), ok on v5e/v6e


def _round_up(x, m):
    return (x + m - 1) // m * m


def _cdiv(a, b):
    return -(-a // b)


def _mlp_kernel(x_ref,
                w1_ref, sh1_ref,
                w2_ref, sh2_ref,
                w3_ref, b3_ref,
                o_ref):
    # fc1 + (folded bias + bn1) + relu   (dropout = identity in eval mode)
    h = jnp.dot(x_ref[...], w1_ref[...],
                preferred_element_type=jnp.float32) + sh1_ref[...]
    h = jnp.maximum(h, 0.0)

    # fc2 + (folded bias + bn2) + relu
    h = jnp.dot(h.astype(w2_ref.dtype), w2_ref[...],
                preferred_element_type=jnp.float32) + sh2_ref[...]
    h = jnp.maximum(h, 0.0)

    # fc3: N=1 matmul -> VPU multiply + two-stage reduce.
    #  stage 1: VPU-add the two lane-aligned 128-wide halves (no XLU)
    #  stage 2: single 128-lane cross-lane reduce per vreg (half the XLU work
    #           of a direct 256-lane reduce, keeping vex slots for vmatmul).
    hw = h * w3_ref[...]                              # (blk, 256) f32, VPU
    hw = hw[:, :128] + hw[:, 128:]                    # (blk, 128) f32, VPU
    o = jnp.sum(hw, axis=-1, keepdims=True) + b3_ref[...]
    o_ref[...] = o.astype(o_ref.dtype)


def emotion_mlp_forward(x, params, *, block_batch=4096,
                        compute_dtype=jnp.bfloat16):
    """x: [B, INPUT_SIZE] float32.  Returns [B, 1] float32.

    compute_dtype: dtype of the MXU operands (x, folded w1, folded w2).
    bfloat16 (default) uses f32 accumulation; pass jnp.float32 for a
    debug/reference path.
    """
    B, D = x.shape
    assert D == INPUT_SIZE
    (w1, b1, s1, t1, w2, b2, s2, t2, w3, b3) = params

    # ---- fold bias + BN affine into the weights (trace-time, zero cost) ----
    #   y = (x @ w + b) * s + t  ==  x @ (w * s) + (b * s + t)
    w1f = w1 * s1
    sh1 = b1 * s1 + t1
    w2f = w2 * s2
    sh2 = b2 * s2 + t2
    w3row = w3.reshape(1, INTERMEDIATE_SIZE)   # (256,1) -> (1,256) row vector

    # ---- pad K: 200 -> 256 (zero rows of w1, zero cols of x) ----
    K = PADDED_INPUT_SIZE
    w1p = jnp.pad(w1f, ((0, K - INPUT_SIZE), (0, 0))).astype(compute_dtype)
    w2c = w2f.astype(compute_dtype)

    # ---- batch tile selection ----
    # Cap: bf16 can use the full block_batch; f32 debug path is capped at
    # 2048 so v5e's smaller scoped VMEM is never pressured.
    if jnp.dtype(compute_dtype) == jnp.dtype(jnp.bfloat16):
        max_blk = block_batch
    else:
        max_blk = min(block_batch, 2048)

    B8 = _round_up(max(B, 8), 8)
    n_tiles = max(1, _cdiv(B8, max_blk))
    # v7x dual-TensorCore: give the 'parallel' grid axis an even number of
    # >= 2 tiles once the batch is big enough to be worth splitting.
    if B8 >= 1024:
        n_tiles = max(2, n_tiles)
        if n_tiles % 2:
            n_tiles += 1
    blk = _round_up(_cdiv(B8, n_tiles), 8)      # balanced tiles, pad < 8*n_tiles
    Bp = blk * n_tiles

    xp = jnp.pad(x, ((0, Bp - B), (0, K - INPUT_SIZE))).astype(compute_dtype)

    grid = (n_tiles,)

    def const_spec(shape):
        # whole-array block, same block for every grid step (fetched once)
        return pl.BlockSpec(shape, lambda i: tuple(0 for _ in shape))

    out = pl.pallas_call(
        _mlp_kernel,
        out_shape=jax.ShapeDtypeStruct((Bp, OUT_SIZE), jnp.float32),
        grid_spec=pltpu.PrefetchScalarGridSpec(
            num_scalar_prefetch=0,
            grid=grid,
            in_specs=[
                pl.BlockSpec((blk, K), lambda i: (i, 0)),
                const_spec(w1p.shape), const_spec(sh1.shape),
                const_spec(w2c.shape), const_spec(sh2.shape),
                const_spec(w3row.shape), const_spec(b3.shape),
            ],
            out_specs=pl.BlockSpec((blk, OUT_SIZE), lambda i: (i, 0)),
        ),
        compiler_params=pltpu.CompilerParams(
            dimension_semantics=("parallel",),
            vmem_limit_bytes=_VMEM_LIMIT_BYTES),
    )(xp, w1p, sh1, w2c, sh2, w3row, b3)

    return out[:B]


def _linear_init(key, fan_in, fan_out):
    """Mimic PyTorch nn.Linear default init: U(-1/sqrt(fan_in), 1/sqrt(fan_in))."""
    kw, kb = jax.random.split(key)
    bound = 1.0 / jnp.sqrt(fan_in)
    # PyTorch stores weight as [out, in]; we keep the transposed [in, out].
    w = jax.random.uniform(kw, (fan_in, fan_out), jnp.float32, -bound, bound)
    b = jax.random.uniform(kb, (1, fan_out), jnp.float32, -bound, bound)
    return w, b


def _bn_init(key, num_features):
    """Deterministic (synthetic) BatchNorm1d params + running stats."""
    kg, kb, km, kv = jax.random.split(key, 4)
    gamma = jax.random.uniform(kg, (1, num_features), jnp.float32, 0.5, 1.5)
    beta = 0.1 * jax.random.normal(kb, (1, num_features), jnp.float32)
    running_mean = 0.1 * jax.random.normal(km, (1, num_features), jnp.float32)
    running_var = jax.random.uniform(kv, (1, num_features), jnp.float32, 0.5, 1.5)
    # fold into affine: y = x * scale + shift
    scale = gamma / jnp.sqrt(running_var + BN_EPS)
    shift = beta - running_mean * scale
    return scale, shift


def make_params(key):
    k1, k2, k3, kb1, kb2 = jax.random.split(key, 5)
    w1, b1 = _linear_init(k1, INPUT_SIZE, HIDDEN_SIZE)
    w2, b2 = _linear_init(k2, HIDDEN_SIZE, INTERMEDIATE_SIZE)
    w3, b3 = _linear_init(k3, INTERMEDIATE_SIZE, OUT_SIZE)
    s1, t1 = _bn_init(kb1, HIDDEN_SIZE)
    s2, t2 = _bn_init(kb2, INTERMEDIATE_SIZE)
    return (w1, b1, s1, t1, w2, b2, s2, t2, w3, b3)


def reference_forward(x, params):
    (w1, b1, s1, t1, w2, b2, s2, t2, w3, b3) = params
    h = jnp.maximum((x @ w1 + b1) * s1 + t1, 0.0)
    h = jnp.maximum((h @ w2 + b2) * s2 + t2, 0.0)
    return h @ w3 + b3


if __name__ == "__main__":
    key = jax.random.PRNGKey(0)
    kx, kp = jax.random.split(key)

    batch = 16
    x = jax.random.normal(kx, (batch, INPUT_SIZE), jnp.float32)
    params = make_params(kp)

    ref = reference_forward(x, params)

    # Default path: bfloat16 MXU operands, f32 accumulation.
    fwd = jax.jit(functools.partial(emotion_mlp_forward))
    out = jax.block_until_ready(fwd(x, params))
    assert out.shape == (batch, 1)
    scale = jnp.max(jnp.abs(ref)) + 1e-6
    rel_err = jnp.max(jnp.abs(out - ref)) / scale
    assert rel_err < 5e-2, f"bf16 relative err = {rel_err}"

    # Debug/reference path: float32 operands, tight check against JAX ref.
    fwd_f32 = jax.jit(functools.partial(
        emotion_mlp_forward, compute_dtype=jnp.float32))
    out_f32 = jax.block_until_ready(fwd_f32(x, params))
    assert jnp.allclose(out_f32, ref, atol=1e-4, rtol=1e-4), (
        f"f32 max abs err = {jnp.max(jnp.abs(out_f32 - ref))}")

    print("KERNEL_OK")
</pallas_src>

<mosaic_0001>
module attributes {stable_mosaic.version = 11 : i64} {
  func.func @_mlp_kernel(%arg0: i32, %arg1: memref<16x256xbf16, #tpu.memory_space<vmem>>, %arg2: memref<256x512xbf16, #tpu.memory_space<vmem>>, %arg3: memref<1x512xf32, #tpu.memory_space<vmem>>, %arg4: memref<512x256xbf16, #tpu.memory_space<vmem>>, %arg5: memref<1x256xf32, #tpu.memory_space<vmem>>, %arg6: memref<1x256xf32, #tpu.memory_space<vmem>>, %arg7: memref<1x1xf32, #tpu.memory_space<vmem>>, %arg8: memref<16x1xf32, #tpu.memory_space<vmem>>) attributes {dimension_semantics = [#tpu.dimension_semantics<parallel>], iteration_bounds = array<i64: 1>, scalar_prefetch = 0 : i64, scratch_operands = 0 : i64, tpu.core_type = #tpu.core_type<tc>, window_params = [{transform_indices = @transform_0, window_bounds = array<i64: 16, 256>}, {pipeline_mode = #tpu.pipeline_mode<synchronous>, transform_indices = @transform_1, window_bounds = array<i64: 256, 512>}, {pipeline_mode = #tpu.pipeline_mode<synchronous>, transform_indices = @transform_2, window_bounds = array<i64: 1, 512>}, {pipeline_mode = #tpu.pipeline_mode<synchronous>, transform_indices = @transform_3, window_bounds = array<i64: 512, 256>}, {pipeline_mode = #tpu.pipeline_mode<synchronous>, transform_indices = @transform_4, window_bounds = array<i64: 1, 256>}, {pipeline_mode = #tpu.pipeline_mode<synchronous>, transform_indices = @transform_5, window_bounds = array<i64: 1, 256>}, {pipeline_mode = #tpu.pipeline_mode<synchronous>, transform_indices = @transform_6, window_bounds = array<i64: 1, 1>}, {transform_indices = @transform_7, window_bounds = array<i64: 16, 1>}]} {
    %c0 = arith.constant 0 : index
    %c0_0 = arith.constant 0 : index
    %0 = vector.load %arg1[%c0, %c0_0] : memref<16x256xbf16, #tpu.memory_space<vmem>>, vector<16x256xbf16>
    %c0_1 = arith.constant 0 : index
    %c0_2 = arith.constant 0 : index
    %1 = vector.load %arg2[%c0_1, %c0_2] : memref<256x512xbf16, #tpu.memory_space<vmem>>, vector<256x512xbf16>
    %cst = arith.constant dense<0.000000e+00> : vector<16x512xf32>
    %2 = tpu.matmul %0, %1, %cst {dimension_numbers = #tpu.dot_dimension_numbers<[1], [0], [0], [1], [0, 0, 1, 1], [], []>} : vector<16x256xbf16>, vector<256x512xbf16>, vector<16x512xf32> -> vector<16x512xf32>
    %c0_3 = arith.constant 0 : index
    %c0_4 = arith.constant 0 : index
    %3 = vector.load %arg3[%c0_3, %c0_4] : memref<1x512xf32, #tpu.memory_space<vmem>>, vector<1x512xf32>
    %4 = vector.broadcast %3 : vector<1x512xf32> to vector<16x512xf32>
    %5 = arith.addf %2, %4 : vector<16x512xf32>
    %cst_5 = arith.constant 0.000000e+00 : f32
    %6 = vector.broadcast %cst_5 : f32 to vector<16x512xf32>
    %7 = arith.maximumf %5, %6 : vector<16x512xf32>
    %8 = arith.truncf %7 : vector<16x512xf32> to vector<16x512xbf16>
    %c0_6 = arith.constant 0 : index
    %c0_7 = arith.constant 0 : index
    %9 = vector.load %arg4[%c0_6, %c0_7] : memref<512x256xbf16, #tpu.memory_space<vmem>>, vector<512x256xbf16>
    %cst_8 = arith.constant dense<0.000000e+00> : vector<16x256xf32>
    %10 = tpu.matmul %8, %9, %cst_8 {dimension_numbers = #tpu.dot_dimension_numbers<[1], [0], [0], [1], [0, 0, 1, 1], [], []>} : vector<16x512xbf16>, vector<512x256xbf16>, vector<16x256xf32> -> vector<16x256xf32>
    %c0_9 = arith.constant 0 : index
    %c0_10 = arith.constant 0 : index
    %11 = vector.load %arg5[%c0_9, %c0_10] : memref<1x256xf32, #tpu.memory_space<vmem>>, vector<1x256xf32>
    %12 = vector.broadcast %11 : vector<1x256xf32> to vector<16x256xf32>
    %13 = arith.addf %10, %12 : vector<16x256xf32>
    %cst_11 = arith.constant 0.000000e+00 : f32
    %14 = vector.broadcast %cst_11 : f32 to vector<16x256xf32>
    %15 = arith.maximumf %13, %14 : vector<16x256xf32>
    %c0_12 = arith.constant 0 : index
    %c0_13 = arith.constant 0 : index
    %16 = vector.load %arg6[%c0_12, %c0_13] : memref<1x256xf32, #tpu.memory_space<vmem>>, vector<1x256xf32>
    %17 = vector.broadcast %16 : vector<1x256xf32> to vector<16x256xf32>
    %18 = arith.mulf %15, %17 : vector<16x256xf32>
    %19 = vector.extract_strided_slice %18 {offsets = [0, 0], sizes = [16, 128], strides = [1, 1]} : vector<16x256xf32> to vector<16x128xf32>
    %20 = vector.extract_strided_slice %18 {offsets = [0, 128], sizes = [16, 128], strides = [1, 1]} : vector<16x256xf32> to vector<16x128xf32>
    %21 = arith.addf %19, %20 : vector<16x128xf32>
    %cst_14 = arith.constant dense<0.000000e+00> : vector<16xf32>
    %22 = vector.multi_reduction <add>, %21, %cst_14 [1] : vector<16x128xf32> to vector<16xf32>
    %23 = vector.shape_cast %22 : vector<16xf32> to vector<16x1xf32>
    %c0_15 = arith.constant 0 : index
    %c0_16 = arith.constant 0 : index
    %24 = vector.load %arg7[%c0_15, %c0_16] : memref<1x1xf32, #tpu.memory_space<vmem>>, vector<1x1xf32>
    %25 = vector.broadcast %24 : vector<1x1xf32> to vector<16x1xf32>
    %26 = arith.addf %23, %25 : vector<16x1xf32>
    %c0_17 = arith.constant 0 : index
    %c0_18 = arith.constant 0 : index
    %27 = vector.load %arg8[%c0_17, %c0_18] : memref<16x1xf32, #tpu.memory_space<vmem>>, vector<16x1xf32>
    tpu.vector_store %arg8[%c0_17, %c0_18], %26 {strides = array<i32>} : memref<16x1xf32, #tpu.memory_space<vmem>>, vector<16x1xf32>,
    return
  }
  func.func @transform_0(%arg0: i32) -> (i32, i32) {
    %c0_i32 = arith.constant 0 : i32
    %c0_i32_0 = arith.constant 0 : i32
    return %arg0, %c0_i32 : i32, i32
  }
  func.func @transform_1(%arg0: i32) -> (i32, i32) {
    %c0_i32 = arith.constant 0 : i32
    %c0_i32_0 = arith.constant 0 : i32
    %c0_i32_1 = arith.constant 0 : i32
    return %c0_i32, %c0_i32_0 : i32, i32
  }
  func.func @transform_2(%arg0: i32) -> (i32, i32) {
    %c0_i32 = arith.constant 0 : i32
    %c0_i32_0 = arith.constant 0 : i32
    %c0_i32_1 = arith.constant 0 : i32
    return %c0_i32, %c0_i32_0 : i32, i32
  }
  func.func @transform_3(%arg0: i32) -> (i32, i32) {
    %c0_i32 = arith.constant 0 : i32
    %c0_i32_0 = arith.constant 0 : i32
    %c0_i32_1 = arith.constant 0 : i32
    return %c0_i32, %c0_i32_0 : i32, i32
  }
  func.func @transform_4(%arg0: i32) -> (i32, i32) {
    %c0_i32 = arith.constant 0 : i32
    %c0_i32_0 = arith.constant 0 : i32
    %c0_i32_1 = arith.constant 0 : i32
    return %c0_i32, %c0_i32_0 : i32, i32
  }
  func.func @transform_5(%arg0: i32) -> (i32, i32) {
    %c0_i32 = arith.constant 0 : i32
    %c0_i32_0 = arith.constant 0 : i32
    %c0_i32_1 = arith.constant 0 : i32
    return %c0_i32, %c0_i32_0 : i32, i32
  }
  func.func @transform_6(%arg0: i32) -> (i32, i32) {
    %c0_i32 = arith.constant 0 : i32
    %c0_i32_0 = arith.constant 0 : i32
    %c0_i32_1 = arith.constant 0 : i32
    return %c0_i32, %c0_i32_0 : i32, i32
  }
  func.func @transform_7(%arg0: i32) -> (i32, i32) {
    %c0_i32 = arith.constant 0 : i32
    %c0_i32_0 = arith.constant 0 : i32
    return %arg0, %c0_i32 : i32, i32
  }
}

</mosaic_0001>

<llo_original>
// kernel: emotion_mlp_forward.1
$region0: #{emotion_mlp_forward.1}
  #allocation0 [shape = 'u32[]', space=smem, size = 0x4, offset = 0x4, fixed_abs, tag = 'smem constant byte address 0x4 - core index']
  #allocation1 [shape = 'u32[144,128]{1,0:T(1,128)}', space=vmem, size = 0x12000, scoped, tag = 'internal scratch']
  #allocation2 [shape = 'f32[1,1]{1,0:T(1,128)S(1)}', space=vmem, size = 0x200, scoped, tag = 'scoped memory for emotion_mlp_forward.1']
  %s0 = inlined_call_operand.vmem [shape: bf16[16,256], index: 0, kind: input, shape index: {}]
  %s1 = inlined_call_operand.vmem [shape: bf16[256,512], index: 1, kind: input, shape index: {}]
  %s2 = inlined_call_operand.vmem [shape: f32[1,512], index: 2, kind: input, shape index: {}]
  %s3 = inlined_call_operand.vmem [shape: bf16[512,256], index: 3, kind: input, shape index: {}]
  %s4 = inlined_call_operand.vmem [shape: f32[1,256], index: 4, kind: input, shape index: {}]
  %s5 = inlined_call_operand.vmem [shape: f32[1,256], index: 5, kind: input, shape index: {}]
  %s6 = inlined_call_operand.<no memory space> [shape: f32[1,1], index: 6, kind: input, shape index: {}]
  %s7 = inlined_call_operand.vmem [shape: f32[16,1], index: 7, kind: output, shape index: {}]
  %s8 = sld [smem:[#allocation0]]
  $region38: #{emotion_mlp_forward.1} parent=0
    _
  %s10 = ssub.s32 1, %s8
  %s11 = scalar_select 0, %s10, %s8
  %v12 = vstv %s6
  %13 = vst [vmem:[#allocation2] sm:$0x1] %v12
  // Predicated region
  $region2: #{emotion_mlp_forward.1} parent=0 // pred_check
    _
  $region3: #{emotion_mlp_forward.1} parent=0 // pred_check_branch
    %15 = sbr.rel (0) target = $region5
  $region4: #{emotion_mlp_forward.1} parent=0 // pred_region
    _
  $region5: #{emotion_mlp_forward.1} parent=0 // pred_fallthru
    _
  // Predicated region
  $region6: #{emotion_mlp_forward.1} parent=0 // pred_check
    _
  $region7: #{emotion_mlp_forward.1} parent=0 // pred_check_branch
    %17 = sbr.rel (0) target = $region9
  $region8: #{emotion_mlp_forward.1} parent=0 // pred_region
    _
  $region9: #{emotion_mlp_forward.1} parent=0 // pred_fallthru
    _
  // Predicated region
  $region10: #{emotion_mlp_forward.1} parent=0 // pred_check
    _
  $region11: #{emotion_mlp_forward.1} parent=0 // pred_check_branch
    %19 = sbr.rel (0) target = $region13
  $region12: #{emotion_mlp_forward.1} parent=0 // pred_region
    _
  $region13: #{emotion_mlp_forward.1} parent=0 // pred_fallthru
    _
  // Predicated region
  $region14: #{emotion_mlp_forward.1} parent=0 // pred_check
    _
  $region15: #{emotion_mlp_forward.1} parent=0 // pred_check_branch
    %21 = sbr.rel (0) target = $region17
  $region16: #{emotion_mlp_forward.1} parent=0 // pred_region
    _
  $region17: #{emotion_mlp_forward.1} parent=0 // pred_fallthru
    _
  // Predicated region
  $region18: #{emotion_mlp_forward.1} parent=0 // pred_check
    _
  $region19: #{emotion_mlp_forward.1} parent=0 // pred_check_branch
    %23 = sbr.rel (0) target = $region21
  $region20: #{emotion_mlp_forward.1} parent=0 // pred_region
    _
  $region21: #{emotion_mlp_forward.1} parent=0 // pred_fallthru
    _
  // Predicated region
  $region22: #{emotion_mlp_forward.1} parent=0 // pred_check
    _
  $region23: #{emotion_mlp_forward.1} parent=0 // pred_check_branch
    %25 = sbr.rel (0) target = $region25
  $region24: #{emotion_mlp_forward.1} parent=0 // pred_region
    _
  $region25: #{emotion_mlp_forward.1} parent=0 // pred_fallthru
    _
  // Predicated region
  $region26: #{emotion_mlp_forward.1} parent=0 // pred_check
    _
  $region27: #{emotion_mlp_forward.1} parent=0 // pred_check_branch
    %27 = sbr.rel (0) target = $region29
  $region28: #{emotion_mlp_forward.1} parent=0 // pred_region
    _
  $region29: #{emotion_mlp_forward.1} parent=0 // pred_fallthru
    _
  %v28 = vld [vmem:[%s0] sm:$0xff]
  %v29 = vld [vmem:[%s0 + $0x8] sm:$0xff]
  %v30 = vld [vmem:[%s1] sm:$0xff]
  %v31 = vld [vmem:[%s1 + $0x8] sm:$0xff]
  %v32 = vld [vmem:[%s1 + $0x10] sm:$0xff]
  %v33 = vld [vmem:[%s1 + $0x18] sm:$0xff]
  %v34 = vld [vmem:[%s1 + $0x20] sm:$0xff]
  %v35 = vld [vmem:[%s1 + $0x28] sm:$0xff]
  %v36 = vld [vmem:[%s1 + $0x30] sm:$0xff]
  %v37 = vld [vmem:[%s1 + $0x38] sm:$0xff]
  %v38 = vld [vmem:[%s1 + $0x40] sm:$0xff]
  %v39 = vld [vmem:[%s1 + $0x48] sm:$0xff]
  %v40 = vld [vmem:[%s1 + $0x50] sm:$0xff]
  %v41 = vld [vmem:[%s1 + $0x58] sm:$0xff]
  %v42 = vld [vmem:[%s1 + $0x60] sm:$0xff]
  %v43 = vld [vmem:[%s1 + $0x68] sm:$0xff]
  %v44 = vld [vmem:[%s1 + $0x70] sm:$0xff]
  %v45 = vld [vmem:[%s1 + $0x78] sm:$0xff]
  %v46 = vld [vmem:[%s1 + $0x80] sm:$0xff]
  %v47 = vld [vmem:[%s1 + $0x88] sm:$0xff]
  %v48 = vld [vmem:[%s1 + $0x90] sm:$0xff]
  %v49 = vld [vmem:[%s1 + $0x98] sm:$0xff]
  %v50 = vld [vmem:[%s1 + $0xa0] sm:$0xff]
  %v51 = vld [vmem:[%s1 + $0xa8] sm:$0xff]
  %v52 = vld [vmem:[%s1 + $0xb0] sm:$0xff]
  %v53 = vld [vmem:[%s1 + $0xb8] sm:$0xff]
  %v54 = vld [vmem:[%s1 + $0xc0] sm:$0xff]
  %v55 = vld [vmem:[%s1 + $0xc8] sm:$0xff]
  %v56 = vld [vmem:[%s1 + $0xd0] sm:$0xff]
  %v57 = vld [vmem:[%s1 + $0xd8] sm:$0xff]
  %v58 = vld [vmem:[%s1 + $0xe0] sm:$0xff]
  %v59 = vld [vmem:[%s1 + $0xe8] sm:$0xff]
  %v60 = vld [vmem:[%s1 + $0xf0] sm:$0xff]
  %v61 = vld [vmem:[%s1 + $0xf8] sm:$0xff]
  %v62 = vld [vmem:[%s1 + $0x100] sm:$0xff]
  %v63 = vld [vmem:[%s1 + $0x108] sm:$0xff]
  %v64 = vld [vmem:[%s1 + $0x110] sm:$0xff]
  %v65 = vld [vmem:[%s1 + $0x118] sm:$0xff]
  %v66 = vld [vmem:[%s1 + $0x120] sm:$0xff]
  %v67 = vld [vmem:[%s1 + $0x128] sm:$0xff]
  %v68 = vld [vmem:[%s1 + $0x130] sm:$0xff]
  %v69 = vld [vmem:[%s1 + $0x138] sm:$0xff]
  %v70 = vld [vmem:[%s1 + $0x140] sm:$0xff]
  %v71 = vld [vmem:[%s1 + $0x148] sm:$0xff]
  %v72 = vld [vmem:[%s1 + $0x150] sm:$0xff]
  %v73 = vld [vmem:[%s1 + $0x158] sm:$0xff]
  %v74 = vld [vmem:[%s1 + $0x160] sm:$0xff]
  %v75 = vld [vmem:[%s1 + $0x168] sm:$0xff]
  %v76 = vld [vmem:[%s1 + $0x170] sm:$0xff]
  %v77 = vld [vmem:[%s1 + $0x178] sm:$0xff]
  %v78 = vld [vmem:[%s1 + $0x180] sm:$0xff]
  %v79 = vld [vmem:[%s1 + $0x188] sm:$0xff]
  %v80 = vld [vmem:[%s1 + $0x190] sm:$0xff]
  %v81 = vld [vmem:[%s1 + $0x198] sm:$0xff]
  %v82 = vld [vmem:[%s1 + $0x1a0] sm:$0xff]
  %v83 = vld [vmem:[%s1 + $0x1a8] sm:$0xff]
  %v84 = vld [vmem:[%s1 + $0x1b0] sm:$0xff]
  %v85 = vld [vmem:[%s1 + $0x1b8] sm:$0xff]
  %v86 = vld [vmem:[%s1 + $0x1c0] sm:$0xff]
  %v87 = vld [vmem:[%s1 + $0x1c8] sm:$0xff]
  %v88 = vld [vmem:[%s1 + $0x1d0] sm:$0xff]
  %v89 = vld [vmem:[%s1 + $0x1d8] sm:$0xff]
  %v90 = vld [vmem:[%s1 + $0x1e0] sm:$0xff]
  %v91 = vld [vmem:[%s1 + $0x1e8] sm:$0xff]
  %v92 = vld [vmem:[%s1 + $0x1f0] sm:$0xff]
  %v93 = vld [vmem:[%s1 + $0x1f8] sm:$0xff]
  %v94 = vld [vmem:[%s2] sm:$0xf]
  %v96 = vlaneseq
  %v97 = vshrl.u32 %v96, 7
  %v98 = vsub.s32 0, %v97
  %v99 = vrot.slane %v94, %v98
  %v100 = vlaneseq
  %v101 = vshrl.u32 %v100, 7
  %v102 = vsub.s32 1, %v101
  %v103 = vrot.slane %v94, %v102
  %v104 = vlaneseq
  %v105 = vshrl.u32 %v104, 7
  %v106 = vsub.s32 2, %v105
  %v107 = vrot.slane %v94, %v106
  %v108 = vlaneseq
  %v109 = vshrl.u32 %v108, 7
  %v110 = vsub.s32 3, %v109
  %v111 = vrot.slane %v94, %v110
  %v118 = vunpack.c.l.b16 %v28
  %v119 = vunpack.c.h.b16 %v28
  %v120 = vunpack.c.l.b16 %v29
  %v121 = vunpack.c.h.b16 %v29
  %v122 = vpack.c.b16 %v120, %v118
  %v123 = vpack.c.b16 %v121, %v119
  %v190 = vunpack.c.l.b16 %v30
  %v191 = vunpack.c.h.b16 %v30
  %v192 = vunpack.c.l.b16 %v31
  %v193 = vunpack.c.h.b16 %v31
  %v194 = vunpack.c.l.b16 %v32
  %v195 = vunpack.c.h.b16 %v32
  %v196 = vunpack.c.l.b16 %v33
  %v197 = vunpack.c.h.b16 %v33
  %v198 = vunpack.c.l.b16 %v34
  %v199 = vunpack.c.h.b16 %v34
  %v200 = vunpack.c.l.b16 %v35
  %v201 = vunpack.c.h.b16 %v35
  %v202 = vunpack.c.l.b16 %v36
  %v203 = vunpack.c.h.b16 %v36
  %v204 = vunpack.c.l.b16 %v37
  %v205 = vunpack.c.h.b16 %v37
  %v206 = vunpack.c.l.b16 %v38
  %v207 = vunpack.c.h.b16 %v38
  %v208 = vunpack.c.l.b16 %v39
  %v209 = vunpack.c.h.b16 %v39
  %v210 = vunpack.c.l.b16 %v40
  %v211 = vunpack.c.h.b16 %v40
  %v212 = vunpack.c.l.b16 %v41
  %v213 = vunpack.c.h.b16 %v41
  %v214 = vunpack.c.l.b16 %v42
  %v215 = vunpack.c.h.b16 %v42
  %v216 = vunpack.c.l.b16 %v43
  %v217 = vunpack.c.h.b16 %v43
  %v218 = vunpack.c.l.b16 %v44
  %v219 = vunpack.c.h.b16 %v44
  %v220 = vunpack.c.l.b16 %v45
  %v221 = vunpack.c.h.b16 %v45
  %v222 = vunpack.c.l.b16 %v46
  %v223 = vunpack.c.h.b16 %v46
  %v224 = vunpack.c.l.b16 %v47
  %v225 = vunpack.c.h.b16 %v47
  %v226 = vunpack.c.l.b16 %v48
  %v227 = vunpack.c.h.b16 %v48
  %v228 = vunpack.c.l.b16 %v49
  %v229 = vunpack.c.h.b16 %v49
  %v230 = vunpack.c.l.b16 %v50
  %v231 = vunpack.c.h.b16 %v50
  %v232 = vunpack.c.l.b16 %v51
  %v233 = vunpack.c.h.b16 %v51
  %v234 = vunpack.c.l.b16 %v52
  %v235 = vunpack.c.h.b16 %v52
  %v236 = vunpack.c.l.b16 %v53
  %v237 = vunpack.c.h.b16 %v53
  %v238 = vunpack.c.l.b16 %v54
  %v239 = vunpack.c.h.b16 %v54
  %v240 = vunpack.c.l.b16 %v55
  %v241 = vunpack.c.h.b16 %v55
  %v242 = vunpack.c.l.b16 %v56
  %v243 = vunpack.c.h.b16 %v56
  %v244 = vunpack.c.l.b16 %v57
  %v245 = vunpack.c.h.b16 %v57
  %v246 = vunpack.c.l.b16 %v58
  %v247 = vunpack.c.h.b16 %v58
  %v248 = vunpack.c.l.b16 %v59
  %v249 = vunpack.c.h.b16 %v59
  %v250 = vunpack.c.l.b16 %v60
  %v251 = vunpack.c.h.b16 %v60
  %v252 = vunpack.c.l.b16 %v61
  %v253 = vunpack.c.h.b16 %v61
  %v254 = vunpack.c.l.b16 %v62
  %v255 = vunpack.c.h.b16 %v62
  %v256 = vunpack.c.l.b16 %v63
  %v257 = vunpack.c.h.b16 %v63
  %v258 = vunpack.c.l.b16 %v64
  %v259 = vunpack.c.h.b16 %v64
  %v260 = vunpack.c.l.b16 %v65
  %v261 = vunpack.c.h.b16 %v65
  %v262 = vunpack.c.l.b16 %v66
  %v263 = vunpack.c.h.b16 %v66
  %v264 = vunpack.c.l.b16 %v67
  %v265 = vunpack.c.h.b16 %v67
  %v266 = vunpack.c.l.b16 %v68
  %v267 = vunpack.c.h.b16 %v68
  %v268 = vunpack.c.l.b16 %v69
  %v269 = vunpack.c.h.b16 %v69
  %v270 = vunpack.c.l.b16 %v70
  %v271 = vunpack.c.h.b16 %v70
  %v272 = vunpack.c.l.b16 %v71
  %v273 = vunpack.c.h.b16 %v71
  %v274 = vunpack.c.l.b16 %v72
  %v275 = vunpack.c.h.b16 %v72
  %v276 = vunpack.c.l.b16 %v73
  %v277 = vunpack.c.h.b16 %v73
  %v278 = vunpack.c.l.b16 %v74
  %v279 = vunpack.c.h.b16 %v74
  %v280 = vunpack.c.l.b16 %v75
  %v281 = vunpack.c.h.b16 %v75
  %v282 = vunpack.c.l.b16 %v76
  %v283 = vunpack.c.h.b16 %v76
  %v284 = vunpack.c.l.b16 %v77
  %v285 = vunpack.c.h.b16 %v77
  %v286 = vunpack.c.l.b16 %v78
  %v287 = vunpack.c.h.b16 %v78
  %v288 = vunpack.c.l.b16 %v79
  %v289 = vunpack.c.h.b16 %v79
  %v290 = vunpack.c.l.b16 %v80
  %v291 = vunpack.c.h.b16 %v80
  %v292 = vunpack.c.l.b16 %v81
  %v293 = vunpack.c.h.b16 %v81
  %v294 = vunpack.c.l.b16 %v82
  %v295 = vunpack.c.h.b16 %v82
  %v296 = vunpack.c.l.b16 %v83
  %v297 = vunpack.c.h.b16 %v83
  %v298 = vunpack.c.l.b16 %v84
  %v299 = vunpack.c.h.b16 %v84
  %v300 = vunpack.c.l.b16 %v85
  %v301 = vunpack.c.h.b16 %v85
  %v302 = vunpack.c.l.b16 %v86
  %v303 = vunpack.c.h.b16 %v86
  %v304 = vunpack.c.l.b16 %v87
  %v305 = vunpack.c.h.b16 %v87
  %v306 = vunpack.c.l.b16 %v88
  %v307 = vunpack.c.h.b16 %v88
  %v308 = vunpack.c.l.b16 %v89
  %v309 = vunpack.c.h.b16 %v89
  %v310 = vunpack.c.l.b16 %v90
  %v311 = vunpack.c.h.b16 %v90
  %v312 = vunpack.c.l.b16 %v91
  %v313 = vunpack.c.h.b16 %v91
  %v314 = vunpack.c.l.b16 %v92
  %v315 = vunpack.c.h.b16 %v92
  %v316 = vunpack.c.l.b16 %v93
  %v317 = vunpack.c.h.b16 %v93
  %v318 = vpack.c.b16 %v194, %v190
  %v319 = vpack.c.b16 %v195, %v191
  %v320 = vpack.c.b16 %v196, %v192
  %v321 = vpack.c.b16 %v197, %v193
  %v322 = vpack.c.b16 %v202, %v198
  %v323 = vpack.c.b16 %v203, %v199
  %v324 = vpack.c.b16 %v204, %v200
  %v325 = vpack.c.b16 %v205, %v201
  %v326 = vpack.c.b16 %v210, %v206
  %v327 = vpack.c.b16 %v211, %v207
  %v328 = vpack.c.b16 %v212, %v208
  %v329 = vpack.c.b16 %v213, %v209
  %v330 = vpack.c.b16 %v218, %v214
  %v331 = vpack.c.b16 %v219, %v215
  %v332 = vpack.c.b16 %v220, %v216
  %v333 = vpack.c.b16 %v221, %v217
  %v334 = vpack.c.b16 %v226, %v222
  %v335 = vpack.c.b16 %v227, %v223
  %v336 = vpack.c.b16 %v228, %v224
  %v337 = vpack.c.b16 %v229, %v225
  %v338 = vpack.c.b16 %v234, %v230
  %v339 = vpack.c.b16 %v235, %v231
  %v340 = vpack.c.b16 %v236, %v232
  %v341 = vpack.c.b16 %v237, %v233
  %v342 = vpack.c.b16 %v242, %v238
  %v343 = vpack.c.b16 %v243, %v239
  %v344 = vpack.c.b16 %v244, %v240
  %v345 = vpack.c.b16 %v245, %v241
  %v346 = vpack.c.b16 %v250, %v246
  %v347 = vpack.c.b16 %v251, %v247
  %v348 = vpack.c.b16 %v252, %v248
  %v349 = vpack.c.b16 %v253, %v249
  %v350 = vpack.c.b16 %v258, %v254
  %v351 = vpack.c.b16 %v259, %v255
  %v352 = vpack.c.b16 %v260, %v256
  %v353 = vpack.c.b16 %v261, %v257
  %v354 = vpack.c.b16 %v266, %v262
  %v355 = vpack.c.b16 %v267, %v263
  %v356 = vpack.c.b16 %v268, %v264
  %v357 = vpack.c.b16 %v269, %v265
  %v358 = vpack.c.b16 %v274, %v270
  %v359 = vpack.c.b16 %v275, %v271
  %v360 = vpack.c.b16 %v276, %v272
  %v361 = vpack.c.b16 %v277, %v273
  %v362 = vpack.c.b16 %v282, %v278
  %v363 = vpack.c.b16 %v283, %v279
  %v364 = vpack.c.b16 %v284, %v280
  %v365 = vpack.c.b16 %v285, %v281
  %v366 = vpack.c.b16 %v290, %v286
  %v367 = vpack.c.b16 %v291, %v287
  %v368 = vpack.c.b16 %v292, %v288
  %v369 = vpack.c.b16 %v293, %v289
  %v370 = vpack.c.b16 %v298, %v294
  %v371 = vpack.c.b16 %v299, %v295
  %v372 = vpack.c.b16 %v300, %v296
  %v373 = vpack.c.b16 %v301, %v297
  %v374 = vpack.c.b16 %v306, %v302
  %v375 = vpack.c.b16 %v307, %v303
  %v376 = vpack.c.b16 %v308, %v304
  %v377 = vpack.c.b16 %v309, %v305
  %v378 = vpack.c.b16 %v314, %v310
  %v379 = vpack.c.b16 %v315, %v311
  %v380 = vpack.c.b16 %v316, %v312
  %v381 = vpack.c.b16 %v317, %v313
  %446 = vmatprep.subr.bf16.mxu0 %v319
  %447 = vmatpush1.bf16.msra.mxu0 %v318
  %448 = vmatprep.subr.bf16.mxu0 %v323
  %449 = vmatpush1.bf16.msra.mxu0 %v322
  %450 = vmatprep.subr.bf16.mxu0 %v327
  %451 = vmatpush1.bf16.msra.mxu0 %v326
  %452 = vmatprep.subr.bf16.mxu0 %v331
  %453 = vmatpush1.bf16.msra.mxu0 %v330
  %454 = vmatprep.subr.bf16.mxu0 %v335
  %455 = vmatpush1.bf16.msra.mxu0 %v334
  %456 = vmatprep.subr.bf16.mxu0 %v339
  %457 = vmatpush1.bf16.msra.mxu0 %v338
  %458 = vmatprep.subr.bf16.mxu0 %v343
  %459 = vmatpush1.bf16.msra.mxu0 %v342
  %460 = vmatprep.subr.bf16.mxu0 %v347
  %461 = vmatpush1.bf16.msra.mxu0 %v346
  %462 = vmatprep.subr.bf16.mxu0 %v351
  %463 = vmatpush1.bf16.msra.mxu0 %v350
  %464 = vmatprep.subr.bf16.mxu0 %v355
  %465 = vmatpush1.bf16.msra.mxu0 %v354
  %466 = vmatprep.subr.bf16.mxu0 %v359
  %467 = vmatpush1.bf16.msra.mxu0 %v358
  %468 = vmatprep.subr.bf16.mxu0 %v363
  %469 = vmatpush1.bf16.msra.mxu0 %v362
  %470 = vmatprep.subr.bf16.mxu0 %v367
  %471 = vmatpush1.bf16.msra.mxu0 %v366
  %472 = vmatprep.subr.bf16.mxu0 %v371
  %473 = vmatpush1.bf16.msra.mxu0 %v370
  %474 = vmatprep.subr.bf16.mxu0 %v375
  %475 = vmatpush1.bf16.msra.mxu0 %v374
  %476 = vmatprep.subr.bf16.mxu0 %v379
  %477 = vmatpush1.bf16.msra.mxu0 %v378
  %478 = vmatprep.mubr.bf16.mxu0 %v123
  %479 = vmatmul.mubr.bf16.gmra.mrb[0].mxu0 %v122
  %v480 = vpop.f32.mrb[0].mxu0
  %v481 = vadd.f32 %v99, %v480
  %v482 = vpop.f32.mrb[0].mxu0
  %v483 = vadd.f32 %v103, %v482
  %v484 = vpop.f32.mrb[0].mxu0
  %v485 = vadd.f32 %v99, %v484
  %v486 = vpop.f32.mrb[0].mxu0
  %v487 = vadd.f32 %v103, %v486
  %488 = vdwg.mxu0
  %489 = vmatprep.subr.bf16.mxu0 %v321
  %490 = vmatpush1.bf16.msra.mxu0 %v320
  %491 = vmatprep.subr.bf16.mxu0 %v325
  %492 = vmatpush1.bf16.msra.mxu0 %v324
  %493 = vmatprep.subr.bf16.mxu0 %v329
  %494 = vmatpush1.bf16.msra.mxu0 %v328
  %495 = vmatprep.subr.bf16.mxu0 %v333
  %496 = vmatpush1.bf16.msra.mxu0 %v332
  %497 = vmatprep.subr.bf16.mxu0 %v337
  %498 = vmatpush1.bf16.msra.mxu0 %v336
  %499 = vmatprep.subr.bf16.mxu0 %v341
  %500 = vmatpush1.bf16.msra.mxu0 %v340
  %501 = vmatprep.subr.bf16.mxu0 %v345
  %502 = vmatpush1.bf16.msra.mxu0 %v344
  %503 = vmatprep.subr.bf16.mxu0 %v349
  %504 = vmatpush1.bf16.msra.mxu0 %v348
  %505 = vmatprep.subr.bf16.mxu0 %v353
  %506 = vmatpush1.bf16.msra.mxu0 %v352
  %507 = vmatprep.subr.bf16.mxu0 %v357
  %508 = vmatpush1.bf16.msra.mxu0 %v356
  %509 = vmatprep.subr.bf16.mxu0 %v361
  %510 = vmatpush1.bf16.msra.mxu0 %v360
  %511 = vmatprep.subr.bf16.mxu0 %v365
  %512 = vmatpush1.bf16.msra.mxu0 %v364
  %513 = vmatprep.subr.bf16.mxu0 %v369
  %514 = vmatpush1.bf16.msra.mxu0 %v368
  %515 = vmatprep.subr.bf16.mxu0 %v373
  %516 = vmatpush1.bf16.msra.mxu0 %v372
  %517 = vmatprep.subr.bf16.mxu0 %v377
  %518 = vmatpush1.bf16.msra.mxu0 %v376
  %519 = vmatprep.subr.bf16.mxu0 %v381
  %520 = vmatpush1.bf16.msra.mxu0 %v380
  %521 = vmatprep.mubr.bf16.mxu0 %v123
  %522 = vmatmul.mubr.bf16.gmra.mrb[0].mxu0 %v122
  %v523 = vpop.f32.mrb[0].mxu0
  %v524 = vadd.f32 %v107, %v523
  %v525 = vpop.f32.mrb[0].mxu0
  %v526 = vadd.f32 %v111, %v525
  %v527 = vpop.f32.mrb[0].mxu0
  %v528 = vadd.f32 %v107, %v527
  %v529 = vpop.f32.mrb[0].mxu0
  %v530 = vadd.f32 %v111, %v529
  %531 = vdwg.mxu0
  %v532 = vmax.f32 %v481, 0.0
  %v533 = vmax.f32 %v483, 0.0
  %v534 = vmax.f32 %v524, 0.0
  %v535 = vmax.f32 %v526, 0.0
  %v536 = vmax.f32 %v485, 0.0
  %v537 = vmax.f32 %v487, 0.0
  %v538 = vmax.f32 %v528, 0.0
  %v539 = vmax.f32 %v530, 0.0
  %v540 = vpack.c.bf16 %v536, %v532
  %v541 = vpack.c.bf16 %v537, %v533
  %v542 = vpack.c.bf16 %v538, %v534
  %v543 = vpack.c.bf16 %v539, %v535
  %v544 = vld [vmem:[%s3] sm:$0xff]
  %v545 = vld [vmem:[%s3 + $0x8] sm:$0xff]
  %v546 = vld [vmem:[%s3 + $0x10] sm:$0xff]
  %v547 = vld [vmem:[%s3 + $0x18] sm:$0xff]
  %v548 = vld [vmem:[%s3 + $0x20] sm:$0xff]
  %v549 = vld [vmem:[%s3 + $0x28] sm:$0xff]
  %v550 = vld [vmem:[%s3 + $0x30] sm:$0xff]
  %v551 = vld [vmem:[%s3 + $0x38] sm:$0xff]
  %v552 = vld [vmem:[%s3 + $0x40] sm:$0xff]
  %v553 = vld [vmem:[%s3 + $0x48] sm:$0xff]
  %v554 = vld [vmem:[%s3 + $0x50] sm:$0xff]
  %v555 = vld [vmem:[%s3 + $0x58] sm:$0xff]
  %v556 = vld [vmem:[%s3 + $0x60] sm:$0xff]
  %v557 = vld [vmem:[%s3 + $0x68] sm:$0xff]
  %v558 = vld [vmem:[%s3 + $0x70] sm:$0xff]
  %v559 = vld [vmem:[%s3 + $0x78] sm:$0xff]
  %v560 = vld [vmem:[%s3 + $0x80] sm:$0xff]
  %v561 = vld [vmem:[%s3 + $0x88] sm:$0xff]
  %v562 = vld [vmem:[%s3 + $0x90] sm:$0xff]
  %v563 = vld [vmem:[%s3 + $0x98] sm:$0xff]
  %v564 = vld [vmem:[%s3 + $0xa0] sm:$0xff]
  %v565 = vld [vmem:[%s3 + $0xa8] sm:$0xff]
  %v566 = vld [vmem:[%s3 + $0xb0] sm:$0xff]
  %v567 = vld [vmem:[%s3 + $0xb8] sm:$0xff]
  %v568 = vld [vmem:[%s3 + $0xc0] sm:$0xff]
  %v569 = vld [vmem:[%s3 + $0xc8] sm:$0xff]
  %v570 = vld [vmem:[%s3 + $0xd0] sm:$0xff]
  %v571 = vld [vmem:[%s3 + $0xd8] sm:$0xff]
  %v572 = vld [vmem:[%s3 + $0xe0] sm:$0xff]
  %v573 = vld [vmem:[%s3 + $0xe8] sm:$0xff]
  %v574 = vld [vmem:[%s3 + $0xf0] sm:$0xff]
  %v575 = vld [vmem:[%s3 + $0xf8] sm:$0xff]
  %v576 = vld [vmem:[%s3 + $0x100] sm:$0xff]
  %v577 = vld [vmem:[%s3 + $0x108] sm:$0xff]
  %v578 = vld [vmem:[%s3 + $0x110] sm:$0xff]
  %v579 = vld [vmem:[%s3 + $0x118] sm:$0xff]
  %v580 = vld [vmem:[%s3 + $0x120] sm:$0xff]
  %v581 = vld [vmem:[%s3 + $0x128] sm:$0xff]
  %v582 = vld [vmem:[%s3 + $0x130] sm:$0xff]
  %v583 = vld [vmem:[%s3 + $0x138] sm:$0xff]
  %v584 = vld [vmem:[%s3 + $0x140] sm:$0xff]
  %v585 = vld [vmem:[%s3 + $0x148] sm:$0xff]
  %v586 = vld [vmem:[%s3 + $0x150] sm:$0xff]
  %v587 = vld [vmem:[%s3 + $0x158] sm:$0xff]
  %v588 = vld [vmem:[%s3 + $0x160] sm:$0xff]
  %v589 = vld [vmem:[%s3 + $0x168] sm:$0xff]
  %v590 = vld [vmem:[%s3 + $0x170] sm:$0xff]
  %v591 = vld [vmem:[%s3 + $0x178] sm:$0xff]
  %v592 = vld [vmem:[%s3 + $0x180] sm:$0xff]
  %v593 = vld [vmem:[%s3 + $0x188] sm:$0xff]
  %v594 = vld [vmem:[%s3 + $0x190] sm:$0xff]
  %v595 = vld [vmem:[%s3 + $0x198] sm:$0xff]
  %v596 = vld [vmem:[%s3 + $0x1a0] sm:$0xff]
  %v597 = vld [vmem:[%s3 + $0x1a8] sm:$0xff]
  %v598 = vld [vmem:[%s3 + $0x1b0] sm:$0xff]
  %v599 = vld [vmem:[%s3 + $0x1b8] sm:$0xff]
  %v600 = vld [vmem:[%s3 + $0x1c0] sm:$0xff]
  %v601 = vld [vmem:[%s3 + $0x1c8] sm:$0xff]
  %v602 = vld [vmem:[%s3 + $0x1d0] sm:$0xff]
  %v603 = vld [vmem:[%s3 + $0x1d8] sm:$0xff]
  %v604 = vld [vmem:[%s3 + $0x1e0] sm:$0xff]
  %v605 = vld [vmem:[%s3 + $0x1e8] sm:$0xff]
  %v606 = vld [vmem:[%s3 + $0x1f0] sm:$0xff]
  %v607 = vld [vmem:[%s3 + $0x1f8] sm:$0xff]
  %v608 = vld [vmem:[%s4] sm:$0x3]
  %v610 = vlaneseq
  %v611 = vshrl.u32 %v610, 7
  %v612 = vsub.s32 0, %v611
  %v613 = vrot.slane %v608, %v612
  %v614 = vlaneseq
  %v615 = vshrl.u32 %v614, 7
  %v616 = vsub.s32 1, %v615
  %v617 = vrot.slane %v608, %v616
  %v684 = vunpack.c.l.b16 %v544
  %v685 = vunpack.c.h.b16 %v544
  %v686 = vunpack.c.l.b16 %v545
  %v687 = vunpack.c.h.b16 %v545
  %v688 = vunpack.c.l.b16 %v546
  %v689 = vunpack.c.h.b16 %v546
  %v690 = vunpack.c.l.b16 %v547
  %v691 = vunpack.c.h.b16 %v547
  %v692 = vunpack.c.l.b16 %v548
  %v693 = vunpack.c.h.b16 %v548
  %v694 = vunpack.c.l.b16 %v549
  %v695 = vunpack.c.h.b16 %v549
  %v696 = vunpack.c.l.b16 %v550
  %v697 = vunpack.c.h.b16 %v550
  %v698 = vunpack.c.l.b16 %v551
  %v699 = vunpack.c.h.b16 %v551
  %v700 = vunpack.c.l.b16 %v552
  %v701 = vunpack.c.h.b16 %v552
  %v702 = vunpack.c.l.b16 %v553
  %v703 = vunpack.c.h.b16 %v553
  %v704 = vunpack.c.l.b16 %v554
  %v705 = vunpack.c.h.b16 %v554
  %v706 = vunpack.c.l.b16 %v555
  %v707 = vunpack.c.h.b16 %v555
  %v708 = vunpack.c.l.b16 %v556
  %v709 = vunpack.c.h.b16 %v556
  %v710 = vunpack.c.l.b16 %v557
  %v711 = vunpack.c.h.b16 %v557
  %v712 = vunpack.c.l.b16 %v558
  %v713 = vunpack.c.h.b16 %v558
  %v714 = vunpack.c.l.b16 %v559
  %v715 = vunpack.c.h.b16 %v559
  %v716 = vunpack.c.l.b16 %v560
  %v717 = vunpack.c.h.b16 %v560
  %v718 = vunpack.c.l.b16 %v561
  %v719 = vunpack.c.h.b16 %v561
  %v720 = vunpack.c.l.b16 %v562
  %v721 = vunpack.c.h.b16 %v562
  %v722 = vunpack.c.l.b16 %v563
  %v723 = vunpack.c.h.b16 %v563
  %v724 = vunpack.c.l.b16 %v564
  %v725 = vunpack.c.h.b16 %v564
  %v726 = vunpack.c.l.b16 %v565
  %v727 = vunpack.c.h.b16 %v565
  %v728 = vunpack.c.l.b16 %v566
  %v729 = vunpack.c.h.b16 %v566
  %v730 = vunpack.c.l.b16 %v567
  %v731 = vunpack.c.h.b16 %v567
  %v732 = vunpack.c.l.b16 %v568
  %v733 = vunpack.c.h.b16 %v568
  %v734 = vunpack.c.l.b16 %v569
  %v735 = vunpack.c.h.b16 %v569
  %v736 = vunpack.c.l.b16 %v570
  %v737 = vunpack.c.h.b16 %v570
  %v738 = vunpack.c.l.b16 %v571
  %v739 = vunpack.c.h.b16 %v571
  %v740 = vunpack.c.l.b16 %v572
  %v741 = vunpack.c.h.b16 %v572
  %v742 = vunpack.c.l.b16 %v573
  %v743 = vunpack.c.h.b16 %v573
  %v744 = vunpack.c.l.b16 %v574
  %v745 = vunpack.c.h.b16 %v574
  %v746 = vunpack.c.l.b16 %v575
  %v747 = vunpack.c.h.b16 %v575
  %v748 = vunpack.c.l.b16 %v576
  %v749 = vunpack.c.h.b16 %v576
  %v750 = vunpack.c.l.b16 %v577
  %v751 = vunpack.c.h.b16 %v577
  %v752 = vunpack.c.l.b16 %v578
  %v753 = vunpack.c.h.b16 %v578
  %v754 = vunpack.c.l.b16 %v579
  %v755 = vunpack.c.h.b16 %v579
  %v756 = vunpack.c.l.b16 %v580
  %v757 = vunpack.c.h.b16 %v580
  %v758 = vunpack.c.l.b16 %v581
  %v759 = vunpack.c.h.b16 %v581
  %v760 = vunpack.c.l.b16 %v582
  %v761 = vunpack.c.h.b16 %v582
  %v762 = vunpack.c.l.b16 %v583
  %v763 = vunpack.c.h.b16 %v583
  %v764 = vunpack.c.l.b16 %v584
  %v765 = vunpack.c.h.b16 %v584
  %v766 = vunpack.c.l.b16 %v585
  %v767 = vunpack.c.h.b16 %v585
  %v768 = vunpack.c.l.b16 %v586
  %v769 = vunpack.c.h.b16 %v586
  %v770 = vunpack.c.l.b16 %v587
  %v771 = vunpack.c.h.b16 %v587
  %v772 = vunpack.c.l.b16 %v588
  %v773 = vunpack.c.h.b16 %v588
  %v774 = vunpack.c.l.b16 %v589
  %v775 = vunpack.c.h.b16 %v589
  %v776 = vunpack.c.l.b16 %v590
  %v777 = vunpack.c.h.b16 %v590
  %v778 = vunpack.c.l.b16 %v591
  %v779 = vunpack.c.h.b16 %v591
  %v780 = vunpack.c.l.b16 %v592
  %v781 = vunpack.c.h.b16 %v592
  %v782 = vunpack.c.l.b16 %v593
  %v783 = vunpack.c.h.b16 %v593
  %v784 = vunpack.c.l.b16 %v594
  %v785 = vunpack.c.h.b16 %v594
  %v786 = vunpack.c.l.b16 %v595
  %v787 = vunpack.c.h.b16 %v595
  %v788 = vunpack.c.l.b16 %v596
  %v789 = vunpack.c.h.b16 %v596
  %v790 = vunpack.c.l.b16 %v597
  %v791 = vunpack.c.h.b16 %v597
  %v792 = vunpack.c.l.b16 %v598
  %v793 = vunpack.c.h.b16 %v598
  %v794 = vunpack.c.l.b16 %v599
  %v795 = vunpack.c.h.b16 %v599
  %v796 = vunpack.c.l.b16 %v600
  %v797 = vunpack.c.h.b16 %v600
  %v798 = vunpack.c.l.b16 %v601
  %v799 = vunpack.c.h.b16 %v601
  %v800 = vunpack.c.l.b16 %v602
  %v801 = vunpack.c.h.b16 %v602
  %v802 = vunpack.c.l.b16 %v603
  %v803 = vunpack.c.h.b16 %v603
  %v804 = vunpack.c.l.b16 %v604
  %v805 = vunpack.c.h.b16 %v604
  %v806 = vunpack.c.l.b16 %v605
  %v807 = vunpack.c.h.b16 %v605
  %v808 = vunpack.c.l.b16 %v606
  %v809 = vunpack.c.h.b16 %v606
  %v810 = vunpack.c.l.b16 %v607
  %v811 = vunpack.c.h.b16 %v607
  %v812 = vpack.c.b16 %v686, %v684
  %v813 = vpack.c.b16 %v687, %v685
  %v814 = vpack.c.b16 %v690, %v688
  %v815 = vpack.c.b16 %v691, %v689
  %v816 = vpack.c.b16 %v694, %v692
  %v817 = vpack.c.b16 %v695, %v693
  %v818 = vpack.c.b16 %v698, %v696
  %v819 = vpack.c.b16 %v699, %v697
  %v820 = vpack.c.b16 %v702, %v700
  %v821 = vpack.c.b16 %v703, %v701
  %v822 = vpack.c.b16 %v706, %v704
  %v823 = vpack.c.b16 %v707, %v705
  %v824 = vpack.c.b16 %v710, %v708
  %v825 = vpack.c.b16 %v711, %v709
  %v826 = vpack.c.b16 %v714, %v712
  %v827 = vpack.c.b16 %v715, %v713
  %v828 = vpack.c.b16 %v718, %v716
  %v829 = vpack.c.b16 %v719, %v717
  %v830 = vpack.c.b16 %v722, %v720
  %v831 = vpack.c.b16 %v723, %v721
  %v832 = vpack.c.b16 %v726, %v724
  %v833 = vpack.c.b16 %v727, %v725
  %v834 = vpack.c.b16 %v730, %v728
  %v835 = vpack.c.b16 %v731, %v729
  %v836 = vpack.c.b16 %v734, %v732
  %v837 = vpack.c.b16 %v735, %v733
  %v838 = vpack.c.b16 %v738, %v736
  %v839 = vpack.c.b16 %v739, %v737
  %v840 = vpack.c.b16 %v742, %v740
  %v841 = vpack.c.b16 %v743, %v741
  %v842 = vpack.c.b16 %v746, %v744
  %v843 = vpack.c.b16 %v747, %v745
  %v844 = vpack.c.b16 %v750, %v748
  %v845 = vpack.c.b16 %v751, %v749
  %v846 = vpack.c.b16 %v754, %v752
  %v847 = vpack.c.b16 %v755, %v753
  %v848 = vpack.c.b16 %v758, %v756
  %v849 = vpack.c.b16 %v759, %v757
  %v850 = vpack.c.b16 %v762, %v760
  %v851 = vpack.c.b16 %v763, %v761
  %v852 = vpack.c.b16 %v766, %v764
  %v853 = vpack.c.b16 %v767, %v765
  %v854 = vpack.c.b16 %v770, %v768
  %v855 = vpack.c.b16 %v771, %v769
  %v856 = vpack.c.b16 %v774, %v772
  %v857 = vpack.c.b16 %v775, %v773
  %v858 = vpack.c.b16 %v778, %v776
  %v859 = vpack.c.b16 %v779, %v777
  %v860 = vpack.c.b16 %v782, %v780
  %v861 = vpack.c.b16 %v783, %v781
  %v862 = vpack.c.b16 %v786, %v784
  %v863 = vpack.c.b16 %v787, %v785
  %v864 = vpack.c.b16 %v790, %v788
  %v865 = vpack.c.b16 %v791, %v789
  %v866 = vpack.c.b16 %v794, %v792
  %v867 = vpack.c.b16 %v795, %v793
  %v868 = vpack.c.b16 %v798, %v796
  %v869 = vpack.c.b16 %v799, %v797
  %v870 = vpack.c.b16 %v802, %v800
  %v871 = vpack.c.b16 %v803, %v801
  %v872 = vpack.c.b16 %v806, %v804
  %v873 = vpack.c.b16 %v807, %v805
  %v874 = vpack.c.b16 %v810, %v808
  %v875 = vpack.c.b16 %v811, %v809
  %940 = vmatprep.subr.bf16.mxu0 %v813
  %941 = vmatpush1.bf16.msra.mxu0 %v812
  %942 = vmatprep.subr.bf16.mxu0 %v815
  %943 = vmatpush1.bf16.msra.mxu0 %v814
  %944 = vmatprep.subr.bf16.mxu0 %v817
  %945 = vmatpush1.bf16.msra.mxu0 %v816
  %946 = vmatprep.subr.bf16.mxu0 %v819
  %947 = vmatpush1.bf16.msra.mxu0 %v818
  %948 = vmatprep.subr.bf16.mxu0 %v821
  %949 = vmatpush1.bf16.msra.mxu0 %v820
  %950 = vmatprep.subr.bf16.mxu0 %v823
  %951 = vmatpush1.bf16.msra.mxu0 %v822
  %952 = vmatprep.subr.bf16.mxu0 %v825
  %953 = vmatpush1.bf16.msra.mxu0 %v824
  %954 = vmatprep.subr.bf16.mxu0 %v827
  %955 = vmatpush1.bf16.msra.mxu0 %v826
  %956 = vmatprep.subr.bf16.mxu0 %v829
  %957 = vmatpush1.bf16.msra.mxu0 %v828
  %958 = vmatprep.subr.bf16.mxu0 %v831
  %959 = vmatpush1.bf16.msra.mxu0 %v830
  %960 = vmatprep.subr.bf16.mxu0 %v833
  %961 = vmatpush1.bf16.msra.mxu0 %v832
  %962 = vmatprep.subr.bf16.mxu0 %v835
  %963 = vmatpush1.bf16.msra.mxu0 %v834
  %964 = vmatprep.subr.bf16.mxu0 %v837
  %965 = vmatpush1.bf16.msra.mxu0 %v836
  %966 = vmatprep.subr.bf16.mxu0 %v839
  %967 = vmatpush1.bf16.msra.mxu0 %v838
  %968 = vmatprep.subr.bf16.mxu0 %v841
  %969 = vmatpush1.bf16.msra.mxu0 %v840
  %970 = vmatprep.subr.bf16.mxu0 %v843
  %971 = vmatpush1.bf16.msra.mxu0 %v842
  %972 = vmatprep.mubr.bf16.mxu0 %v541
  %973 = vmatmul.mubr.bf16.gmra.mrb[0].mxu0 %v540
  %v974 = vpop.f32.mrb[0].mxu0
  %v975 = vadd.f32 %v613, %v974
  %v976 = vpop.f32.mrb[0].mxu0
  %v977 = vadd.f32 %v617, %v976
  %v978 = vpop.f32.mrb[0].mxu0
  %v979 = vadd.f32 %v613, %v978
  %v980 = vpop.f32.mrb[0].mxu0
  %v981 = vadd.f32 %v617, %v980
  %982 = vdwg.mxu0
  %983 = vmatprep.subr.bf16.mxu0 %v845
  %984 = vmatpush1.bf16.msra.mxu0 %v844
  %985 = vmatprep.subr.bf16.mxu0 %v847
  %986 = vmatpush1.bf16.msra.mxu0 %v846
  %987 = vmatprep.subr.bf16.mxu0 %v849
  %988 = vmatpush1.bf16.msra.mxu0 %v848
  %989 = vmatprep.subr.bf16.mxu0 %v851
  %990 = vmatpush1.bf16.msra.mxu0 %v850
  %991 = vmatprep.subr.bf16.mxu0 %v853
  %992 = vmatpush1.bf16.msra.mxu0 %v852
  %993 = vmatprep.subr.bf16.mxu0 %v855
  %994 = vmatpush1.bf16.msra.mxu0 %v854
  %995 = vmatprep.subr.bf16.mxu0 %v857
  %996 = vmatpush1.bf16.msra.mxu0 %v856
  %997 = vmatprep.subr.bf16.mxu0 %v859
  %998 = vmatpush1.bf16.msra.mxu0 %v858
  %999 = vmatprep.subr.bf16.mxu0 %v861
  %1000 = vmatpush1.bf16.msra.mxu0 %v860
  %1001 = vmatprep.subr.bf16.mxu0 %v863
  %1002 = vmatpush1.bf16.msra.mxu0 %v862
  %1003 = vmatprep.subr.bf16.mxu0 %v865
  %1004 = vmatpush1.bf16.msra.mxu0 %v864
  %1005 = vmatprep.subr.bf16.mxu0 %v867
  %1006 = vmatpush1.bf16.msra.mxu0 %v866
  %1007 = vmatprep.subr.bf16.mxu0 %v869
  %1008 = vmatpush1.bf16.msra.mxu0 %v868
  %1009 = vmatprep.subr.bf16.mxu0 %v871
  %1010 = vmatpush1.bf16.msra.mxu0 %v870
  %1011 = vmatprep.subr.bf16.mxu0 %v873
  %1012 = vmatpush1.bf16.msra.mxu0 %v872
  %1013 = vmatprep.subr.bf16.mxu0 %v875
  %1014 = vmatpush1.bf16.msra.mxu0 %v874
  %1015 = vmatprep.mubr.bf16.mxu0 %v543
  %1016 = vmatmul.mubr.bf16.gmra.mrb[0].mxu0 %v542
  %v1017 = vpop.f32.mrb[0].mxu0
  %v1018 = vadd.f32 %v975, %v1017
  %v1019 = vpop.f32.mrb[0].mxu0
  %v1020 = vadd.f32 %v977, %v1019
  %v1021 = vpop.f32.mrb[0].mxu0
  %v1022 = vadd.f32 %v979, %v1021
  %v1023 = vpop.f32.mrb[0].mxu0
  %v1024 = vadd.f32 %v981, %v1023
  %1025 = vdwg.mxu0
  %v1026 = vmax.f32 %v1018, 0.0
  %v1027 = vmax.f32 %v1020, 0.0
  %v1028 = vmax.f32 %v1022, 0.0
  %v1029 = vmax.f32 %v1024, 0.0
  %v1030 = vld [vmem:[%s5] sm:$0x3]
  %v1032 = vlaneseq
  %v1033 = vshrl.u32 %v1032, 7
  %v1034 = vsub.s32 0, %v1033
  %v1035 = vrot.slane %v1030, %v1034
  %v1036 = vlaneseq
  %v1037 = vshrl.u32 %v1036, 7
  %v1038 = vsub.s32 1, %v1037
  %v1039 = vrot.slane %v1030, %v1038
  %v1042 = vmul.f32 %v1026, %v1035
  %v1043 = vmul.f32 %v1027, %v1039
  %v1044 = vmul.f32 %v1028, %v1035
  %v1045 = vmul.f32 %v1029, %v1039
  %v1046 = vadd.f32 %v1042, %v1043
  %v1047 = vadd.f32 %v1044, %v1045
  %1048 = vadd.xlane.f32.xlu0 %v1046
  %v1049 = vpop.xlane.xlu0 %1048
  %1050 = vadd.xlane.f32.xlu0 %v1047
  %v1051 = vpop.xlane.xlu0 %1050
  %v1052 = vld [vmem:[#allocation2] sm:$0x1]
  %v1054 = vlaneseq
  %v1055 = vshrl.u32 %v1054, 7
  %v1056 = vsub.s32 0, %v1055
  %v1057 = vrot.slane %v1052, %v1056
  %v1059 = vadd.f32 %v1049, %v1057
  %v1060 = vadd.f32 %v1051, %v1057
  %vm1061 = vcmask 7168
  %1062 = vst.msk [vmem:[%s7] sm:$0xff] %vm1061, %v1059
  %1063 = vst.msk [vmem:[%s7 + $0x8] sm:$0xff] %vm1061, %v1060
  // Predicated region
  $region30: #{emotion_mlp_forward.1} parent=0 // pred_check
    _
  $region31: #{emotion_mlp_forward.1} parent=0 // pred_check_branch
    %1065 = sbr.rel (0) target = $region33
  $region32: #{emotion_mlp_forward.1} parent=0 // pred_region
    _
  $region33: #{emotion_mlp_forward.1} parent=0 // pred_fallthru
    _
  // Predicated region
  $region34: #{emotion_mlp_forward.1} parent=0 // pred_check
    _
  $region35: #{emotion_mlp_forward.1} parent=0 // pred_check_branch
    %1067 = sbr.rel (0) target = $region37
  $region36: #{emotion_mlp_forward.1} parent=0 // pred_region
    _
  $region37: #{emotion_mlp_forward.1} parent=0 // pred_fallthru
    _

</llo_original>
